<compile_context>
chip_gen: v5e
topology: v5e:2x2
jax: 0.10.0
libtpu: 0.0.40
codegen_flags: <defaults>
</compile_context>

<pallas_src>
import functools

import jax
import jax.numpy as jnp
from jax.experimental import pallas as pl
from jax.experimental.pallas import tpu as pltpu

EPS = 1e-5
H1 = 128          # fc1 output
H2 = 64           # fc2 output
OUT = 4           # fc3 output (logits)


# --------------------------------------------------------------------------
# Kernel
# --------------------------------------------------------------------------
def gdp_mlp_kernel(x_ref, w1_ref, b1_ref, w2_ref, b2_ref, w3_ref, b3_ref, o_ref):
    """Fused 3-layer MLP. BN already folded into (w1,b1),(w2,b2). Dropout = id."""
    x = x_ref[...].astype(jnp.bfloat16)                       # bf16 MXU operands
    h = jnp.dot(x, w1_ref[...], preferred_element_type=jnp.float32) + b1_ref[...]
    h = jnp.maximum(h, 0.0)                                    # relu (dropout: identity)
    h = jnp.dot(h.astype(jnp.bfloat16), w2_ref[...],
                preferred_element_type=jnp.float32) + b2_ref[...]
    h = jnp.maximum(h, 0.0)                                    # relu (dropout: identity)
    out = jnp.dot(h.astype(jnp.bfloat16), w3_ref[...],
                  preferred_element_type=jnp.float32) + b3_ref[...]
    o_ref[...] = out.astype(o_ref.dtype)


# --------------------------------------------------------------------------
# One-time host-side parameter preparation (hoisted out of the forward pass)
# --------------------------------------------------------------------------
def _fold_bn(w, b, gamma, beta, mean, var):
    """Fold eval-mode BatchNorm into the preceding Linear (algebraically exact)."""
    s = gamma * jax.lax.rsqrt(var + EPS)          # (1, H)
    return w * s, (b - mean) * s + beta


def prepare_params(params):
    """Fold BN into the Linears and cast weights to bf16. Call ONCE at load time."""
    w1f, b1f = _fold_bn(params["w1"], params["b1"], params["g1"], params["be1"],
                        params["m1"], params["v1"])
    w2f, b2f = _fold_bn(params["w2"], params["b2"], params["g2"], params["be2"],
                        params["m2"], params["v2"])
    return (
        w1f.astype(jnp.bfloat16), b1f.astype(jnp.float32),
        w2f.astype(jnp.bfloat16), b2f.astype(jnp.float32),
        params["w3"].astype(jnp.bfloat16), params["b3"].astype(jnp.float32),
    )


# --------------------------------------------------------------------------
# Wrapper
# --------------------------------------------------------------------------
def _full_spec(a):
    nd = a.ndim
    return pl.BlockSpec(a.shape, lambda *_: (0,) * nd)


def _choose_batch_tile(batch, batch_tile):
    """Pick (TB, n_tiles): even tile count (balanced across v7x's 2 TCs),
    TB a multiple of 8 (sublane alignment for the batch block dim)."""
    n = -(-batch // batch_tile)
    if n > 1 and n % 2 == 1:
        n += 1
    tb = -(-batch // n)
    tb = ((tb + 7) // 8) * 8
    n = -(-batch // tb)
    return tb, n


@functools.partial(jax.jit, static_argnames=("batch_tile",))
def gdp_classifier_forward(x, prepared, *, batch_tile=512):
    """x: (B, input_size). prepared: output of prepare_params(). Returns (B, 4)."""
    B, F = x.shape
    weights = list(prepared)

    if B <= batch_tile:
        # Small batch: single invocation, no grid, no pipeline overhead.
        return pl.pallas_call(
            gdp_mlp_kernel,
            out_shape=jax.ShapeDtypeStruct((B, OUT), jnp.float32),
            in_specs=[_full_spec(x)] + [_full_spec(w) for w in weights],
            out_specs=pl.BlockSpec((B, OUT), lambda *_: (0, 0)),
        )(x, *weights)

    # Large batch: tile over batch; weights stay VMEM-resident (constant maps).
    # Ragged last tile handled by Pallas' masked boundary block (rows are
    # independent), so no host-side jnp.pad of x and no output slice.
    TB, n_tiles = _choose_batch_tile(B, batch_tile)

    x_blk_bytes = TB * F * jnp.dtype(x.dtype).itemsize
    out_blk_bytes = TB * OUT * 4
    w_bytes = sum(int(w.size) * jnp.dtype(w.dtype).itemsize for w in weights)
    vmem_limit = 2 * (x_blk_bytes + out_blk_bytes) + 2 * w_bytes + (8 << 20)
    vmem_limit = int(max(16 << 20, min(vmem_limit, 100 << 20)))

    w_spec = lambda a: pl.BlockSpec(a.shape, lambda i: (0, 0))
    return pl.pallas_call(
        gdp_mlp_kernel,
        out_shape=jax.ShapeDtypeStruct((B, OUT), jnp.float32),
        grid=(n_tiles,),
        in_specs=[pl.BlockSpec((TB, F), lambda i: (i, 0))]
                 + [w_spec(w) for w in weights],
        out_specs=pl.BlockSpec((TB, OUT), lambda i: (i, 0)),
        compiler_params=pltpu.CompilerParams(
            dimension_semantics=("parallel",),     # shards across v7x's 2 TCs
            vmem_limit_bytes=vmem_limit,
        ),
    )(x, *weights)


# --------------------------------------------------------------------------
# Deterministic synthetic params + pure-JAX reference
# --------------------------------------------------------------------------
def init_params(key, input_size):
    """Deterministic synthetic params, shapes matching GDPClassifier.__init__."""
    ks = jax.random.split(key, 14)

    def lin(kw, kb, fan_in, fan_out):
        bound = 1.0 / jnp.sqrt(jnp.float32(fan_in))
        w = jax.random.uniform(kw, (fan_in, fan_out), jnp.float32, -bound, bound)
        b = jax.random.uniform(kb, (1, fan_out), jnp.float32, -bound, bound)
        return w, b

    def bn(kg, kb, km, kv, n):
        g = jax.random.uniform(kg, (1, n), jnp.float32, 0.5, 1.5)
        be = 0.1 * jax.random.normal(kb, (1, n), jnp.float32)
        m = 0.1 * jax.random.normal(km, (1, n), jnp.float32)
        v = jax.random.uniform(kv, (1, n), jnp.float32, 0.5, 1.5)
        return g, be, m, v

    w1, b1 = lin(ks[0], ks[1], input_size, H1)
    g1, be1, m1, v1 = bn(ks[2], ks[3], ks[4], ks[5], H1)
    w2, b2 = lin(ks[6], ks[7], H1, H2)
    g2, be2, m2, v2 = bn(ks[8], ks[9], ks[10], ks[11], H2)
    w3, b3 = lin(ks[12], ks[13], H2, OUT)

    return dict(
        w1=w1, b1=b1, g1=g1, be1=be1, m1=m1, v1=v1,
        w2=w2, b2=b2, g2=g2, be2=be2, m2=m2, v2=v2,
        w3=w3, b3=b3,
    )


def reference_forward(x, p):
    """Pure-JAX f32 reference (un-folded) of the eval-mode forward."""
    h = x @ p["w1"] + p["b1"]
    h = (h - p["m1"]) * (p["g1"] / jnp.sqrt(p["v1"] + EPS)) + p["be1"]
    h = jnp.maximum(h, 0.0)
    h = h @ p["w2"] + p["b2"]
    h = (h - p["m2"]) * (p["g2"] / jnp.sqrt(p["v2"] + EPS)) + p["be2"]
    h = jnp.maximum(h, 0.0)
    return h @ p["w3"] + p["b3"]


if __name__ == "__main__":
    INPUT_SIZE = 32

    key = jax.random.PRNGKey(0)
    kx, kp, kx2 = jax.random.split(key, 3)
    params = init_params(kp, INPUT_SIZE)
    prepared = prepare_params(params)          # one-time prep: BN fold + bf16 cast

    # Small batch -> grid-less single-invocation path.
    x_small = jax.random.normal(kx, (8, INPUT_SIZE), jnp.float32)
    out_small = jax.block_until_ready(gdp_classifier_forward(x_small, prepared))
    ref_small = reference_forward(x_small, params)
    assert out_small.shape == (8, OUT)
    assert jnp.allclose(out_small, ref_small, atol=5e-2, rtol=5e-2), \
        "small-batch mismatch vs JAX reference"

    # Larger batch -> batch-tiled ('parallel') grid with a ragged final tile
    # (exercises the masked boundary block: 1040 rows, 4 tiles of 264).
    x_big = jax.random.normal(kx2, (1040, INPUT_SIZE), jnp.float32)
    out_big = jax.block_until_ready(
        gdp_classifier_forward(x_big, prepared, batch_tile=512))
    ref_big = reference_forward(x_big, params)
    assert out_big.shape == (1040, OUT)
    assert jnp.allclose(out_big, ref_big, atol=5e-2, rtol=5e-2), \
        "tiled-batch mismatch vs JAX reference"

    print("KERNEL_OK")
</pallas_src>

<mosaic_0001>
module attributes {stable_mosaic.version = 11 : i64} {
  func.func @gdp_mlp_kernel(%arg0: memref<8x32xf32, #tpu.memory_space<vmem>>, %arg1: memref<32x128xbf16, #tpu.memory_space<vmem>>, %arg2: memref<1x128xf32, #tpu.memory_space<vmem>>, %arg3: memref<128x64xbf16, #tpu.memory_space<vmem>>, %arg4: memref<1x64xf32, #tpu.memory_space<vmem>>, %arg5: memref<64x4xbf16, #tpu.memory_space<vmem>>, %arg6: memref<1x4xf32, #tpu.memory_space<vmem>>, %arg7: memref<8x4xf32, #tpu.memory_space<vmem>>) attributes {dimension_semantics = [], scalar_prefetch = 0 : i64, scratch_operands = 0 : i64, tpu.core_type = #tpu.core_type<tc>} {
    %c0 = arith.constant 0 : index
    %c0_0 = arith.constant 0 : index
    %0 = vector.load %arg0[%c0, %c0_0] : memref<8x32xf32, #tpu.memory_space<vmem>>, vector<8x32xf32>
    %1 = arith.truncf %0 : vector<8x32xf32> to vector<8x32xbf16>
    %c0_1 = arith.constant 0 : index
    %c0_2 = arith.constant 0 : index
    %2 = vector.load %arg1[%c0_1, %c0_2] : memref<32x128xbf16, #tpu.memory_space<vmem>>, vector<32x128xbf16>
    %cst = arith.constant dense<0.000000e+00> : vector<8x128xf32>
    %3 = tpu.matmul %1, %2, %cst {dimension_numbers = #tpu.dot_dimension_numbers<[1], [0], [0], [1], [0, 0, 1, 1], [], []>} : vector<8x32xbf16>, vector<32x128xbf16>, vector<8x128xf32> -> vector<8x128xf32>
    %c0_3 = arith.constant 0 : index
    %c0_4 = arith.constant 0 : index
    %4 = vector.load %arg2[%c0_3, %c0_4] : memref<1x128xf32, #tpu.memory_space<vmem>>, vector<1x128xf32>
    %5 = vector.broadcast %4 : vector<1x128xf32> to vector<8x128xf32>
    %6 = arith.addf %3, %5 : vector<8x128xf32>
    %cst_5 = arith.constant 0.000000e+00 : f32
    %7 = vector.broadcast %cst_5 : f32 to vector<8x128xf32>
    %8 = arith.maximumf %6, %7 : vector<8x128xf32>
    %9 = arith.truncf %8 : vector<8x128xf32> to vector<8x128xbf16>
    %c0_6 = arith.constant 0 : index
    %c0_7 = arith.constant 0 : index
    %10 = vector.load %arg3[%c0_6, %c0_7] : memref<128x64xbf16, #tpu.memory_space<vmem>>, vector<128x64xbf16>
    %cst_8 = arith.constant dense<0.000000e+00> : vector<8x64xf32>
    %11 = tpu.matmul %9, %10, %cst_8 {dimension_numbers = #tpu.dot_dimension_numbers<[1], [0], [0], [1], [0, 0, 1, 1], [], []>} : vector<8x128xbf16>, vector<128x64xbf16>, vector<8x64xf32> -> vector<8x64xf32>
    %c0_9 = arith.constant 0 : index
    %c0_10 = arith.constant 0 : index
    %12 = vector.load %arg4[%c0_9, %c0_10] : memref<1x64xf32, #tpu.memory_space<vmem>>, vector<1x64xf32>
    %13 = vector.broadcast %12 : vector<1x64xf32> to vector<8x64xf32>
    %14 = arith.addf %11, %13 : vector<8x64xf32>
    %cst_11 = arith.constant 0.000000e+00 : f32
    %15 = vector.broadcast %cst_11 : f32 to vector<8x64xf32>
    %16 = arith.maximumf %14, %15 : vector<8x64xf32>
    %17 = arith.truncf %16 : vector<8x64xf32> to vector<8x64xbf16>
    %c0_12 = arith.constant 0 : index
    %c0_13 = arith.constant 0 : index
    %18 = vector.load %arg5[%c0_12, %c0_13] : memref<64x4xbf16, #tpu.memory_space<vmem>>, vector<64x4xbf16>
    %cst_14 = arith.constant dense<0.000000e+00> : vector<8x4xf32>
    %19 = tpu.matmul %17, %18, %cst_14 {dimension_numbers = #tpu.dot_dimension_numbers<[1], [0], [0], [1], [0, 0, 1, 1], [], []>} : vector<8x64xbf16>, vector<64x4xbf16>, vector<8x4xf32> -> vector<8x4xf32>
    %c0_15 = arith.constant 0 : index
    %c0_16 = arith.constant 0 : index
    %20 = vector.load %arg6[%c0_15, %c0_16] : memref<1x4xf32, #tpu.memory_space<vmem>>, vector<1x4xf32>
    %21 = vector.broadcast %20 : vector<1x4xf32> to vector<8x4xf32>
    %22 = arith.addf %19, %21 : vector<8x4xf32>
    %c0_17 = arith.constant 0 : index
    %c0_18 = arith.constant 0 : index
    %23 = vector.load %arg7[%c0_17, %c0_18] : memref<8x4xf32, #tpu.memory_space<vmem>>, vector<8x4xf32>
    tpu.vector_store %arg7[%c0_17, %c0_18], %22 {strides = array<i32>} : memref<8x4xf32, #tpu.memory_space<vmem>>, vector<8x4xf32>,
    return
  }
}

</mosaic_0001>

<llo_original>
// kernel: gdp_classifier_forward.1
$region0: #{gdp_classifier_forward.1}
  #allocation0 [shape = 'u32[]', space=smem, size = 0x4, offset = 0x4, fixed_abs, tag = 'smem constant byte address 0x4 - core index']
  #allocation1 [shape = 'u32[72,128]{1,0:T(1,128)}', space=vmem, size = 0x9000, scoped, tag = 'internal scratch']
  %s0 = inlined_call_operand.vmem [shape: f32[8,32], index: 0, kind: input, shape index: {}]
  %s1 = inlined_call_operand.vmem [shape: bf16[32,128], index: 1, kind: input, shape index: {}]
  %s2 = inlined_call_operand.vmem [shape: f32[1,128], index: 2, kind: input, shape index: {}]
  %s3 = inlined_call_operand.vmem [shape: bf16[128,64], index: 3, kind: input, shape index: {}]
  %s4 = inlined_call_operand.vmem [shape: f32[1,64], index: 4, kind: input, shape index: {}]
  %s5 = inlined_call_operand.vmem [shape: bf16[64,4], index: 5, kind: input, shape index: {}]
  %s6 = inlined_call_operand.vmem [shape: f32[1,4], index: 6, kind: input, shape index: {}]
  %s7 = inlined_call_operand.vmem [shape: f32[8,4], index: 7, kind: output, shape index: {}]
  %s8 = sld [smem:[#allocation0]]
  $region38: #{gdp_classifier_forward.1} parent=0
    _
  %s10 = ssub.s32 1, %s8
  %s11 = scalar_select 0, %s10, %s8
  // Predicated region
  $region2: #{gdp_classifier_forward.1} parent=0 // pred_check
    _
  $region3: #{gdp_classifier_forward.1} parent=0 // pred_check_branch
    %13 = sbr.rel (0) target = $region5
  $region4: #{gdp_classifier_forward.1} parent=0 // pred_region
    _
  $region5: #{gdp_classifier_forward.1} parent=0 // pred_fallthru
    _
  // Predicated region
  $region6: #{gdp_classifier_forward.1} parent=0 // pred_check
    _
  $region7: #{gdp_classifier_forward.1} parent=0 // pred_check_branch
    %15 = sbr.rel (0) target = $region9
  $region8: #{gdp_classifier_forward.1} parent=0 // pred_region
    _
  $region9: #{gdp_classifier_forward.1} parent=0 // pred_fallthru
    _
  // Predicated region
  $region10: #{gdp_classifier_forward.1} parent=0 // pred_check
    _
  $region11: #{gdp_classifier_forward.1} parent=0 // pred_check_branch
    %17 = sbr.rel (0) target = $region13
  $region12: #{gdp_classifier_forward.1} parent=0 // pred_region
    _
  $region13: #{gdp_classifier_forward.1} parent=0 // pred_fallthru
    _
  // Predicated region
  $region14: #{gdp_classifier_forward.1} parent=0 // pred_check
    _
  $region15: #{gdp_classifier_forward.1} parent=0 // pred_check_branch
    %19 = sbr.rel (0) target = $region17
  $region16: #{gdp_classifier_forward.1} parent=0 // pred_region
    _
  $region17: #{gdp_classifier_forward.1} parent=0 // pred_fallthru
    _
  // Predicated region
  $region18: #{gdp_classifier_forward.1} parent=0 // pred_check
    _
  $region19: #{gdp_classifier_forward.1} parent=0 // pred_check_branch
    %21 = sbr.rel (0) target = $region21
  $region20: #{gdp_classifier_forward.1} parent=0 // pred_region
    _
  $region21: #{gdp_classifier_forward.1} parent=0 // pred_fallthru
    _
  // Predicated region
  $region22: #{gdp_classifier_forward.1} parent=0 // pred_check
    _
  $region23: #{gdp_classifier_forward.1} parent=0 // pred_check_branch
    %23 = sbr.rel (0) target = $region25
  $region24: #{gdp_classifier_forward.1} parent=0 // pred_region
    _
  $region25: #{gdp_classifier_forward.1} parent=0 // pred_fallthru
    _
  // Predicated region
  $region26: #{gdp_classifier_forward.1} parent=0 // pred_check
    _
  $region27: #{gdp_classifier_forward.1} parent=0 // pred_check_branch
    %25 = sbr.rel (0) target = $region29
  $region28: #{gdp_classifier_forward.1} parent=0 // pred_region
    _
  $region29: #{gdp_classifier_forward.1} parent=0 // pred_fallthru
    _
  %v27 = vld [vmem:[%s0] sm:$0xff]
  %v28 = vpack.c.bf16 %v27, %v27
  %v29 = vld [vmem:[%s1] sm:$0xf]
  %v30 = vld [vmem:[%s1 + $0x4] sm:$0xf]
  %v31 = vld [vmem:[%s1 + $0x8] sm:$0xf]
  %v32 = vld [vmem:[%s1 + $0xc] sm:$0xf]
  %v33 = vld [vmem:[%s2] sm:$0x1]
  %v35 = vperm.slane %v33, 0
  %v41 = vunpack.c.l.b16 %v29
  %v42 = vunpack.c.l.b16 %v30
  %v43 = vunpack.c.l.b16 %v31
  %v44 = vunpack.c.l.b16 %v32
  %v45 = vpack.c.b16 %v42, %v41
  %v46 = vpack.c.b16 %v44, %v43
  %vm49 = vcmask 261120
  %v51 = vsel %vm49, %v28, 0
  %53 = vmatpush.bf16.msra.mxu0 0
  %54 = vmatpush.bf16.msra.mxu0 0
  %55 = vmatpush.bf16.msra.mxu0 0
  %56 = vmatpush.bf16.msra.mxu0 0
  %57 = vmatpush.bf16.msra.mxu0 0
  %58 = vmatpush.bf16.msra.mxu0 0
  %59 = vmatpush.bf16.msra.mxu0 %v46
  %60 = vmatpush.bf16.msra.mxu0 %v45
  %61 = vmatmul.bf16.gmra.mxu0 %v51
  %v62 = vpop.f32.mrf.mxu0
  %v63 = vadd.f32 %v35, %v62
  %v64 = vpop.f32.mrf.mxu0
  %65 = vdwg.mxu0
  %v66 = vmax.f32 %v63, 0.0
  %v67 = vpack.c.bf16 %v66, %v66
  %v68 = vld [vmem:[%s3] sm:$0xf]
  %v69 = vld [vmem:[%s3 + $0x4] sm:$0xf]
  %v70 = vld [vmem:[%s3 + $0x8] sm:$0xf]
  %v71 = vld [vmem:[%s3 + $0xc] sm:$0xf]
  %v72 = vld [vmem:[%s3 + $0x10] sm:$0xf]
  %v73 = vld [vmem:[%s3 + $0x14] sm:$0xf]
  %v74 = vld [vmem:[%s3 + $0x18] sm:$0xf]
  %v75 = vld [vmem:[%s3 + $0x1c] sm:$0xf]
  %v76 = vld [vmem:[%s3 + $0x20] sm:$0xf]
  %v77 = vld [vmem:[%s3 + $0x24] sm:$0xf]
  %v78 = vld [vmem:[%s3 + $0x28] sm:$0xf]
  %v79 = vld [vmem:[%s3 + $0x2c] sm:$0xf]
  %v80 = vld [vmem:[%s3 + $0x30] sm:$0xf]
  %v81 = vld [vmem:[%s3 + $0x34] sm:$0xf]
  %v82 = vld [vmem:[%s3 + $0x38] sm:$0xf]
  %v83 = vld [vmem:[%s3 + $0x3c] sm:$0xf]
  %v84 = vld [vmem:[%s4] sm:$0x1]
  %v86 = vperm.slane %v84, 0
  %v104 = vunpack.c.l.b16 %v68
  %v105 = vunpack.c.l.b16 %v69
  %v106 = vunpack.c.l.b16 %v70
  %v107 = vunpack.c.l.b16 %v71
  %v108 = vunpack.c.l.b16 %v72
  %v109 = vunpack.c.l.b16 %v73
  %v110 = vunpack.c.l.b16 %v74
  %v111 = vunpack.c.l.b16 %v75
  %v112 = vunpack.c.l.b16 %v76
  %v113 = vunpack.c.l.b16 %v77
  %v114 = vunpack.c.l.b16 %v78
  %v115 = vunpack.c.l.b16 %v79
  %v116 = vunpack.c.l.b16 %v80
  %v117 = vunpack.c.l.b16 %v81
  %v118 = vunpack.c.l.b16 %v82
  %v119 = vunpack.c.l.b16 %v83
  %v120 = vpack.c.b16 %v105, %v104
  %v121 = vpack.c.b16 %v107, %v106
  %v122 = vpack.c.b16 %v109, %v108
  %v123 = vpack.c.b16 %v111, %v110
  %v124 = vpack.c.b16 %v113, %v112
  %v125 = vpack.c.b16 %v115, %v114
  %v126 = vpack.c.b16 %v117, %v116
  %v127 = vpack.c.b16 %v119, %v118
  %136 = vmatpush.bf16.msra.mxu0 %v127
  %137 = vmatpush.bf16.msra.mxu0 %v126
  %138 = vmatpush.bf16.msra.mxu0 %v125
  %139 = vmatpush.bf16.msra.mxu0 %v124
  %140 = vmatpush.bf16.msra.mxu0 %v123
  %141 = vmatpush.bf16.msra.mxu0 %v122
  %142 = vmatpush.bf16.msra.mxu0 %v121
  %143 = vmatpush.bf16.msra.mxu0 %v120
  %144 = vmatmul.bf16.gmra.mxu0 %v67
  %v145 = vpop.f32.mrf.mxu0
  %v146 = vadd.f32 %v86, %v145
  %v147 = vpop.f32.mrf.mxu0
  %148 = vdwg.mxu0
  %v149 = vmax.f32 %v146, 0.0
  %v150 = vpack.c.bf16 %v149, %v149
  %v151 = vld [vmem:[%s5] sm:$0xf]
  %v152 = vld [vmem:[%s5 + $0x4] sm:$0xf]
  %v153 = vld [vmem:[%s5 + $0x8] sm:$0xf]
  %v154 = vld [vmem:[%s5 + $0xc] sm:$0xf]
  %v155 = vld [vmem:[%s5 + $0x10] sm:$0xf]
  %v156 = vld [vmem:[%s5 + $0x14] sm:$0xf]
  %v157 = vld [vmem:[%s5 + $0x18] sm:$0xf]
  %v158 = vld [vmem:[%s5 + $0x1c] sm:$0xf]
  %v159 = vld [vmem:[%s6] sm:$0x1]
  %v161 = vperm.slane %v159, 0
  %v171 = vunpack.c.l.b16 %v151
  %v172 = vunpack.c.l.b16 %v152
  %v173 = vunpack.c.l.b16 %v153
  %v174 = vunpack.c.l.b16 %v154
  %v175 = vunpack.c.l.b16 %v155
  %v176 = vunpack.c.l.b16 %v156
  %v177 = vunpack.c.l.b16 %v157
  %v178 = vunpack.c.l.b16 %v158
  %v179 = vpack.c.b16 %v172, %v171
  %v180 = vpack.c.b16 %v174, %v173
  %v181 = vpack.c.b16 %v176, %v175
  %v182 = vpack.c.b16 %v178, %v177
  %vm187 = vcmask 523264
  %v189 = vsel %vm187, %v150, 0
  %191 = vmatpush.bf16.msra.mxu0 0
  %192 = vmatpush.bf16.msra.mxu0 0
  %193 = vmatpush.bf16.msra.mxu0 0
  %194 = vmatpush.bf16.msra.mxu0 0
  %195 = vmatpush.bf16.msra.mxu0 %v182
  %196 = vmatpush.bf16.msra.mxu0 %v181
  %197 = vmatpush.bf16.msra.mxu0 %v180
  %198 = vmatpush.bf16.msra.mxu0 %v179
  %199 = vmatmul.bf16.gmra.mxu0 %v189
  %v200 = vpop.f32.mrf.mxu0
  %v201 = vadd.f32 %v161, %v200
  %v202 = vpop.f32.mrf.mxu0
  %203 = vdwg.mxu0
  %vm204 = vcmask 31744
  %205 = vst.msk [vmem:[%s7] sm:$0xff] %vm204, %v201
  // Predicated region
  $region30: #{gdp_classifier_forward.1} parent=0 // pred_check
    _
  $region31: #{gdp_classifier_forward.1} parent=0 // pred_check_branch
    %207 = sbr.rel (0) target = $region33
  $region32: #{gdp_classifier_forward.1} parent=0 // pred_region
    _
  $region33: #{gdp_classifier_forward.1} parent=0 // pred_fallthru
    _
  // Predicated region
  $region34: #{gdp_classifier_forward.1} parent=0 // pred_check
    _
  $region35: #{gdp_classifier_forward.1} parent=0 // pred_check_branch
    %209 = sbr.rel (0) target = $region37
  $region36: #{gdp_classifier_forward.1} parent=0 // pred_region
    _
  $region37: #{gdp_classifier_forward.1} parent=0 // pred_fallthru
    _

</llo_original>
